<compile_context>
chip_gen: v6e
topology: v6e:2x2x1
jax: 0.10.0
libtpu: 0.0.40
codegen_flags: <defaults>
</compile_context>

<pallas_src>
import jax
import jax.numpy as jnp
from jax.experimental import pallas as pl
from jax.experimental.pallas import tpu as pltpu


# dot_general dimension numbers for "A @ B.T" (contract on last dim of both).
_NT_DIMS = (((1,), (1,)), ((), ()))


def monotonic_nn_kernel(xo_ref, xm_ref, w1_ref, b1_ref, w2_ref, b2_ref, o_ref):
    # xo_ref: (TB, D_other)   xm_ref: (TB, n_mono)
    # w1_ref: (D_other, 48)   b1_ref: (1, 48)
    # w2_ref: (48, n_mono)    b2_ref: (1, n_mono)
    # o_ref : (1, TB)         lane-dense output row
    #
    # Linear(other_dim -> 48).  Inputs may be bf16 or f32; promotion happens in
    # VMEM and accumulation is f32 on the MXU.
    h = jnp.dot(xo_ref[...], w1_ref[...], preferred_element_type=jnp.float32)
    h = h + b1_ref[...]
    # LeakyReLU(0.1) in maximum form (exact for slope < 1, fewer VALU ops).
    h = jnp.maximum(h, 0.1 * h)

    # Linear(48 -> n_mono)
    c = jnp.dot(h, w2_ref[...], preferred_element_type=jnp.float32)
    c = c + b2_ref[...]
    c = jnp.maximum(c, 0.0)  # ReLU

    # Elementwise product with the monotonic features.
    contrib = c * xm_ref[...].astype(jnp.float32)            # (TB, n_mono)

    # Per-row feature reduction emitted lane-dense: ones(1,n) contracted against
    # contrib's feature axis gives a (1, TB) row directly (transposed-RHS dot).
    ones_row = jnp.ones((1, contrib.shape[1]), dtype=jnp.float32)
    row = jax.lax.dot_general(ones_row, contrib, _NT_DIMS,
                              preferred_element_type=jnp.float32)  # (1, TB)
    o_ref[...] = row.astype(o_ref.dtype)


def _reference_forward(x_other, x_monotonic, w1, b1, w2, b2):
    """Pure-JAX forward (also used as the small-batch fallback)."""
    h = x_other.astype(jnp.float32) @ w1 + b1
    h = jnp.where(h > 0, h, 0.1 * h)
    c = jnp.maximum(h @ w2 + b2, 0.0)
    return jnp.sum(c * x_monotonic.astype(jnp.float32), axis=1, keepdims=True)


def _round_up(x, m):
    return ((x + m - 1) // m) * m


def simple_monotonic_nn(x_other, x_monotonic, w1, b1, w2, b2, *,
                        tile_b=1024,
                        min_pallas_batch=128,
                        vmem_budget_bytes=8 * 1024 * 1024):
    """Forward pass of SimpleMonotonicNN.

    x_other:     (B, other_dim)   f32 or bf16
    x_monotonic: (B, n_mono)      f32 or bf16
    w1: (other_dim, 48)  b1: (48,)  w2: (48, n_mono)  b2: (n_mono,)  (f32)
    Returns (B, 1) in x_other.dtype.
    """
    B, D_other = x_other.shape
    n_mono = x_monotonic.shape[1]
    hidden = w1.shape[1]
    out_dtype = x_other.dtype

    # Tiny batches: fixed custom-call / grid-setup overhead dwarfs the few KiB
    # of data moved; let XLA fuse the whole thing instead.
    if B < min_pallas_batch:
        return _reference_forward(x_other, x_monotonic, w1, b1, w2, b2).astype(out_dtype)

    b1_2d = b1.reshape(1, -1).astype(jnp.float32)
    b2_2d = b2.reshape(1, -1).astype(jnp.float32)

    # ---- batch-tile selection (128-lane aligned, VMEM-budgeted) --------------
    itm_o = x_other.dtype.itemsize
    itm_m = x_monotonic.dtype.itemsize
    # Double-buffered activation inputs + double-buffered output column, per row.
    row_bytes = 2 * (D_other * itm_o + n_mono * itm_m + 4)
    tb_budget = max(128, (vmem_budget_bytes // row_bytes) // 128 * 128)
    tb = min(_round_up(max(tile_b, 128), 128), tb_budget, _round_up(B, 128))
    # v7x megacore: guarantee >= 2 grid steps for B >= 256 so ("parallel",) can
    # shard steps across both TensorCores (no-op on single-TC v5e/v6e).
    if B >= 256:
        tb = min(tb, _round_up(pl.cdiv(B, 2), 128))
    grid = (pl.cdiv(B, tb),)

    # VMEM estimate; only exceeds the default scoped limit when the caller
    # raises the budget for very large D_other, in which case we raise the
    # scoped limit too (stay under v7x's 64 MiB physical VMEM).
    vmem_est = row_bytes * tb + 4 * (w1.size + w2.size + b1_2d.size + b2_2d.size)
    vmem_limit = None
    if vmem_est > 12 * 1024 * 1024:
        vmem_limit = int(min(1.5 * vmem_est + (1 << 20), 60 * 1024 * 1024))

    flops = 2 * B * (D_other * hidden + hidden * n_mono + n_mono)
    bytes_accessed = (x_other.size * itm_o + x_monotonic.size * itm_m
                      + 4 * (w1.size + w2.size + b1_2d.size + b2_2d.size)
                      + B * jnp.dtype(out_dtype).itemsize)

    out_row = pl.pallas_call(
        monotonic_nn_kernel,
        out_shape=jax.ShapeDtypeStruct((1, B), out_dtype),
        grid_spec=pltpu.PrefetchScalarGridSpec(
            num_scalar_prefetch=0,
            grid=grid,
            in_specs=[
                pl.BlockSpec((tb, D_other), lambda i: (i, 0)),   # x_other tile
                pl.BlockSpec((tb, n_mono), lambda i: (i, 0)),    # x_monotonic tile
                pl.BlockSpec(w1.shape, lambda i: (0, 0)),        # W1 (grid-invariant)
                pl.BlockSpec(b1_2d.shape, lambda i: (0, 0)),     # b1
                pl.BlockSpec(w2.shape, lambda i: (0, 0)),        # W2
                pl.BlockSpec(b2_2d.shape, lambda i: (0, 0)),     # b2
            ],
            out_specs=pl.BlockSpec((1, tb), lambda i: (0, i)),   # lane-dense row
        ),
        compiler_params=pltpu.CompilerParams(
            dimension_semantics=("parallel",),
            vmem_limit_bytes=vmem_limit,
        ),
        cost_estimate=pl.CostEstimate(
            flops=int(flops),
            transcendentals=0,
            bytes_accessed=int(bytes_accessed),
        ),
    )(x_other, x_monotonic, w1, b1_2d, w2, b2_2d)

    # (1, B) -> (B, 1): pure reinterpretation of the same contiguous data.
    return out_row.reshape(B, 1)


if __name__ == "__main__":
    key = jax.random.PRNGKey(0)
    k_xo, k_xm, k_w1, k_b1, k_w2, k_b2 = jax.random.split(key, 6)

    other_dim = 32      # other_input_dim
    hidden = 48
    n_mono = 10         # second linear output / monotonic feature count

    # Deterministic parameter init (Linear weights stored as (in, out)).
    w1 = jax.random.normal(k_w1, (other_dim, hidden), dtype=jnp.float32) * 0.1
    b1 = jax.random.normal(k_b1, (hidden,), dtype=jnp.float32) * 0.1
    w2 = jax.random.normal(k_w2, (hidden, n_mono), dtype=jnp.float32) * 0.1
    b2 = jax.random.normal(k_b2, (n_mono,), dtype=jnp.float32) * 0.1

    def make_inputs(batch, dtype=jnp.float32):
        xo = jax.random.normal(k_xo, (batch, other_dim), dtype=jnp.float32).astype(dtype)
        xm = jax.random.normal(k_xm, (batch, n_mono), dtype=jnp.float32).astype(dtype)
        return xo, xm

    # Case 1: Pallas path, batch divisible by the tile (grid=(2,): both TCs on v7x).
    B = 256
    xo, xm = make_inputs(B)
    out = jax.block_until_ready(simple_monotonic_nn(xo, xm, w1, b1, w2, b2))
    ref = _reference_forward(xo, xm, w1, b1, w2, b2)
    assert out.shape == (B, 1), out.shape
    assert jnp.allclose(out, ref, atol=1e-5, rtol=1e-5), "mismatch vs reference (B=256)"

    # Case 2: ragged batch -> partial final block, no wrapper-side padding pass.
    B = 300
    xo, xm = make_inputs(B)
    out = jax.block_until_ready(simple_monotonic_nn(xo, xm, w1, b1, w2, b2))
    ref = _reference_forward(xo, xm, w1, b1, w2, b2)
    assert out.shape == (B, 1), out.shape
    assert jnp.allclose(out, ref, atol=1e-5, rtol=1e-5), "mismatch vs reference (B=300)"

    # Case 3: bf16 activations accepted directly at the kernel boundary
    # (f32 accumulation inside; only bf16 input/output rounding differs).
    B = 512
    xo, xm = make_inputs(B, dtype=jnp.bfloat16)
    out = jax.block_until_ready(simple_monotonic_nn(xo, xm, w1, b1, w2, b2))
    ref = _reference_forward(xo, xm, w1, b1, w2, b2)
    assert out.shape == (B, 1), out.shape
    assert jnp.allclose(out.astype(jnp.float32), ref, atol=3e-2, rtol=2e-2), \
        "mismatch vs reference (bf16)"

    # Case 4: tiny batch -> XLA fallback path (custom-call overhead not worth it).
    B = 32
    xo, xm = make_inputs(B)
    out = jax.block_until_ready(simple_monotonic_nn(xo, xm, w1, b1, w2, b2))
    ref = _reference_forward(xo, xm, w1, b1, w2, b2)
    assert out.shape == (B, 1), out.shape
    assert jnp.allclose(out, ref, atol=1e-5, rtol=1e-5), "mismatch vs reference (B=32)"

    print("KERNEL_OK")
</pallas_src>

<mosaic_0001>
module attributes {stable_mosaic.version = 11 : i64} {
  func.func @monotonic_nn_kernel(%arg0: i32, %arg1: memref<128x32xf32, #tpu.memory_space<vmem>>, %arg2: memref<128x10xf32, #tpu.memory_space<vmem>>, %arg3: memref<32x48xf32, #tpu.memory_space<vmem>>, %arg4: memref<1x48xf32, #tpu.memory_space<vmem>>, %arg5: memref<48x10xf32, #tpu.memory_space<vmem>>, %arg6: memref<1x10xf32, #tpu.memory_space<vmem>>, %arg7: memref<1x128xf32, #tpu.memory_space<vmem>>) attributes {dimension_semantics = [#tpu.dimension_semantics<parallel>], iteration_bounds = array<i64: 2>, scalar_prefetch = 0 : i64, scratch_operands = 0 : i64, tpu.core_type = #tpu.core_type<tc>, window_params = [{transform_indices = @transform_0, window_bounds = array<i64: 128, 32>}, {transform_indices = @transform_1, window_bounds = array<i64: 128, 10>}, {pipeline_mode = #tpu.pipeline_mode<synchronous>, transform_indices = @transform_2, window_bounds = array<i64: 32, 48>}, {pipeline_mode = #tpu.pipeline_mode<synchronous>, transform_indices = @transform_3, window_bounds = array<i64: 1, 48>}, {pipeline_mode = #tpu.pipeline_mode<synchronous>, transform_indices = @transform_4, window_bounds = array<i64: 48, 10>}, {pipeline_mode = #tpu.pipeline_mode<synchronous>, transform_indices = @transform_5, window_bounds = array<i64: 1, 10>}, {transform_indices = @transform_6, window_bounds = array<i64: 1, 128>}]} {
    %c0 = arith.constant 0 : index
    %c0_0 = arith.constant 0 : index
    %0 = vector.load %arg1[%c0, %c0_0] : memref<128x32xf32, #tpu.memory_space<vmem>>, vector<128x32xf32>
    %c0_1 = arith.constant 0 : index
    %c0_2 = arith.constant 0 : index
    %1 = vector.load %arg3[%c0_1, %c0_2] : memref<32x48xf32, #tpu.memory_space<vmem>>, vector<32x48xf32>
    %cst = arith.constant dense<0.000000e+00> : vector<128x48xf32>
    %2 = tpu.matmul %0, %1, %cst {dimension_numbers = #tpu.dot_dimension_numbers<[1], [0], [0], [1], [0, 0, 1, 1], [], []>} : vector<128x32xf32>, vector<32x48xf32>, vector<128x48xf32> -> vector<128x48xf32>
    %c0_3 = arith.constant 0 : index
    %c0_4 = arith.constant 0 : index
    %3 = vector.load %arg4[%c0_3, %c0_4] : memref<1x48xf32, #tpu.memory_space<vmem>>, vector<1x48xf32>
    %4 = vector.broadcast %3 : vector<1x48xf32> to vector<128x48xf32>
    %5 = arith.addf %2, %4 : vector<128x48xf32>
    %cst_5 = arith.constant 1.000000e-01 : f32
    %6 = vector.broadcast %cst_5 : f32 to vector<128x48xf32>
    %7 = arith.mulf %6, %5 : vector<128x48xf32>
    %8 = arith.maximumf %5, %7 : vector<128x48xf32>
    %c0_6 = arith.constant 0 : index
    %c0_7 = arith.constant 0 : index
    %9 = vector.load %arg5[%c0_6, %c0_7] : memref<48x10xf32, #tpu.memory_space<vmem>>, vector<48x10xf32>
    %cst_8 = arith.constant dense<0.000000e+00> : vector<128x10xf32>
    %10 = tpu.matmul %8, %9, %cst_8 {dimension_numbers = #tpu.dot_dimension_numbers<[1], [0], [0], [1], [0, 0, 1, 1], [], []>} : vector<128x48xf32>, vector<48x10xf32>, vector<128x10xf32> -> vector<128x10xf32>
    %c0_9 = arith.constant 0 : index
    %c0_10 = arith.constant 0 : index
    %11 = vector.load %arg6[%c0_9, %c0_10] : memref<1x10xf32, #tpu.memory_space<vmem>>, vector<1x10xf32>
    %12 = vector.broadcast %11 : vector<1x10xf32> to vector<128x10xf32>
    %13 = arith.addf %10, %12 : vector<128x10xf32>
    %cst_11 = arith.constant 0.000000e+00 : f32
    %14 = vector.broadcast %cst_11 : f32 to vector<128x10xf32>
    %15 = arith.maximumf %13, %14 : vector<128x10xf32>
    %c0_12 = arith.constant 0 : index
    %c0_13 = arith.constant 0 : index
    %16 = vector.load %arg2[%c0_12, %c0_13] : memref<128x10xf32, #tpu.memory_space<vmem>>, vector<128x10xf32>
    %17 = arith.mulf %15, %16 : vector<128x10xf32>
    %cst_14 = arith.constant 1.000000e+00 : f32
    %18 = vector.broadcast %cst_14 : f32 to vector<1x10xf32>
    %cst_15 = arith.constant dense<0.000000e+00> : vector<1x128xf32>
    %19 = tpu.matmul %18, %17, %cst_15 {dimension_numbers = #tpu.dot_dimension_numbers<[1], [1], [0], [0], [0, 0, 1, 0], [], []>} : vector<1x10xf32>, vector<128x10xf32>, vector<1x128xf32> -> vector<1x128xf32>
    %c0_16 = arith.constant 0 : index
    %c0_17 = arith.constant 0 : index
    %20 = vector.load %arg7[%c0_16, %c0_17] : memref<1x128xf32, #tpu.memory_space<vmem>>, vector<1x128xf32>
    tpu.vector_store %arg7[%c0_16, %c0_17], %19 {strides = array<i32>} : memref<1x128xf32, #tpu.memory_space<vmem>>, vector<1x128xf32>,
    return
  }
  func.func @transform_0(%arg0: i32) -> (i32, i32) {
    %c0_i32 = arith.constant 0 : i32
    %c0_i32_0 = arith.constant 0 : i32
    return %arg0, %c0_i32 : i32, i32
  }
  func.func @transform_1(%arg0: i32) -> (i32, i32) {
    %c0_i32 = arith.constant 0 : i32
    %c0_i32_0 = arith.constant 0 : i32
    return %arg0, %c0_i32 : i32, i32
  }
  func.func @transform_2(%arg0: i32) -> (i32, i32) {
    %c0_i32 = arith.constant 0 : i32
    %c0_i32_0 = arith.constant 0 : i32
    %c0_i32_1 = arith.constant 0 : i32
    return %c0_i32, %c0_i32_0 : i32, i32
  }
  func.func @transform_3(%arg0: i32) -> (i32, i32) {
    %c0_i32 = arith.constant 0 : i32
    %c0_i32_0 = arith.constant 0 : i32
    %c0_i32_1 = arith.constant 0 : i32
    return %c0_i32, %c0_i32_0 : i32, i32
  }
  func.func @transform_4(%arg0: i32) -> (i32, i32) {
    %c0_i32 = arith.constant 0 : i32
    %c0_i32_0 = arith.constant 0 : i32
    %c0_i32_1 = arith.constant 0 : i32
    return %c0_i32, %c0_i32_0 : i32, i32
  }
  func.func @transform_5(%arg0: i32) -> (i32, i32) {
    %c0_i32 = arith.constant 0 : i32
    %c0_i32_0 = arith.constant 0 : i32
    %c0_i32_1 = arith.constant 0 : i32
    return %c0_i32, %c0_i32_0 : i32, i32
  }
  func.func @transform_6(%arg0: i32) -> (i32, i32) {
    %c0_i32 = arith.constant 0 : i32
    %c0_i32_0 = arith.constant 0 : i32
    return %c0_i32, %arg0 : i32, i32
  }
}

</mosaic_0001>

<llo_original>
// kernel: tpu_custom_call.1
$region0: #{tpu_custom_call.1}
  #allocation0 [shape = 'u32[]', space=smem, size = 0x4, offset = 0x4, fixed_abs, tag = 'smem constant byte address 0x4 - core index']
  #allocation1 [shape = 'u32[144,128]{1,0:T(1,128)}', space=vmem, size = 0x12000, scoped, tag = 'internal scratch']
  %s0 = inlined_call_operand.vmem [shape: f32[256,32], index: 0, kind: input, shape index: {}]
  %s1 = inlined_call_operand.vmem [shape: f32[256,10], index: 1, kind: input, shape index: {}]
  %s2 = inlined_call_operand.vmem [shape: f32[32,48], index: 2, kind: input, shape index: {}]
  %s3 = inlined_call_operand.vmem [shape: f32[1,48], index: 3, kind: input, shape index: {}]
  %s4 = inlined_call_operand.vmem [shape: f32[48,10], index: 4, kind: input, shape index: {}]
  %s5 = inlined_call_operand.vmem [shape: f32[1,10], index: 5, kind: input, shape index: {}]
  %s6 = inlined_call_operand.hbm [shape: f32[1,256], index: 6, kind: output, shape index: {}]
  %s7 = sld [smem:[#allocation0]]
  $region57: #{tpu_custom_call.1} parent=0
    _
  %s9 = ssub.s32 1, %s7
  %s10 = scalar_select 0, %s9, %s7
  $region1: #{tpu_custom_call.1} parent=0
    #allocation2 [shape = 'u8[1024]{0}', space=vmem, size = 0x400, scoped, tag = 'output window, operand 0']
    #allocation3 [shape = 's32[2]{0}', space=sflag, size = 0x8, scoped, tag = 'scoped memory for tpu_custom_call.1']
    %11 = vsyncpa [#allocation3], 0
    %s12 = scalar_lea.sflag [#allocation3], 1
    %13 = vsyncpa %s12, 0
    loop: start=0, step=1, limit=4
    $region2: #{tpu_custom_call.1} parent=1 // loop_pre_header
      _
    $region3: #{tpu_custom_call.1} parent=1 // loop_header
      %s15 = sphi 0, %s19
      %p16 = scmp.ge.s32.totalorder %s15, 4
      %s25 = sphi 0, %s27
      %s28 = sphi 0, %s25
      %s29 = sphi 0, %s28
      %s45 = sphi 0, %s29
      %s51 = sphi 0, %s53
      %s54 = sphi 0, %s51
      %s55 = sphi 0, %s54
      %s71 = sphi 0, %s55
      %s75 = sphi 0, %s75
      %s77 = sphi 0, %s75
      %s78 = sphi 0, %s77
      %s92 = sphi 0, %s78
      %s96 = sphi 0, %s96
      %s98 = sphi 0, %s96
      %s99 = sphi 0, %s98
      %s113 = sphi 0, %s99
      %s117 = sphi 0, %s117
      %s119 = sphi 0, %s117
      %s120 = sphi 0, %s119
      %s134 = sphi 0, %s120
      %s138 = sphi 0, %s138
      %s140 = sphi 0, %s138
      %s141 = sphi 0, %s140
      %s155 = sphi 0, %s141
      %s161 = sphi 0, %s163
      %s164 = sphi 0, %s161
      %s165 = sphi 0, %s164
      %s181 = sphi 0, %s165
    $region4: #{tpu_custom_call.1} parent=1 // loop_header_branch
      %18 = sbr.rel (%p16) target = $region8
    $region5: #{tpu_custom_call.1} parent=1 // loop_body
      %s20 = ssub.s32 %s15, 1
      %s21 = ssub.s32 %s15, 2
      %s22 = sadd.s32 %s15, 1
      %s23 = ssub.s32 %s15, %s22
      %p24 = scmp.eq.s32.totalorder %s23, 0
      %s26 = sadd.s32 %s25, 1
      %s27 = scalar_select %p24, %s25, %s26
      %p30 = pneg %p24
      %p31 = scmp.eq.s32.totalorder %s15, 1
      %p32 = por %p30, %p31
      %p33 = scmp.ne.s32.totalorder %s25, %s28
      %p34 = scmp.eq.s32.totalorder %s15, 0
      %p35 = por %p33, %p34
      %p36 = scmp.ne.s32.totalorder %s25, %s28
      %p37 = scmp.eq.s32.totalorder %s20, 1
      %p38 = por %p36, %p37
      %p39 = scmp.ne.s32.totalorder %s28, %s29
      %p40 = scmp.eq.s32.totalorder %s20, 0
      %p41 = por %p39, %p40
      %p42 = scmp.ne.s32.totalorder %s28, %s29
      %p43 = scmp.eq.s32.totalorder %s21, 1
      %p44 = por %p42, %p43
      %p46 = scmp.ne.s32.totalorder %s29, %s45
      %p47 = scmp.eq.s32.totalorder %s21, 0
      %p48 = por %p46, %p47
      %s49 = ssub.s32 %s15, %s22
      %p50 = scmp.eq.s32.totalorder %s49, 0
      %s52 = sadd.s32 %s51, 1
      %s53 = scalar_select %p50, %s51, %s52
      %p56 = pneg %p50
      %p57 = scmp.eq.s32.totalorder %s15, 1
      %p58 = por %p56, %p57
      %p59 = scmp.ne.s32.totalorder %s51, %s54
      %p60 = scmp.eq.s32.totalorder %s15, 0
      %p61 = por %p59, %p60
      %p62 = scmp.ne.s32.totalorder %s51, %s54
      %p63 = scmp.eq.s32.totalorder %s20, 1
      %p64 = por %p62, %p63
      %p65 = scmp.ne.s32.totalorder %s54, %s55
      %p66 = scmp.eq.s32.totalorder %s20, 0
      %p67 = por %p65, %p66
      %p68 = scmp.ne.s32.totalorder %s54, %s55
      %p69 = scmp.eq.s32.totalorder %s21, 1
      %p70 = por %p68, %p69
      %p72 = scmp.ne.s32.totalorder %s55, %s71
      %p73 = scmp.eq.s32.totalorder %s21, 0
      %p74 = por %p72, %p73
      %s76 = sadd.s32 %s75, 1
      %p79 = scmp.eq.s32.totalorder %s15, 1
      %p80 = scmp.ne.s32.totalorder %s75, %s77
      %p81 = scmp.eq.s32.totalorder %s15, 0
      %p82 = por %p80, %p81
      %p83 = scmp.ne.s32.totalorder %s75, %s77
      %p84 = scmp.eq.s32.totalorder %s20, 1
      %p85 = por %p83, %p84
      %p86 = scmp.ne.s32.totalorder %s77, %s78
      %p87 = scmp.eq.s32.totalorder %s20, 0
      %p88 = por %p86, %p87
      %p89 = scmp.ne.s32.totalorder %s77, %s78
      %p90 = scmp.eq.s32.totalorder %s21, 1
      %p91 = por %p89, %p90
      %p93 = scmp.ne.s32.totalorder %s78, %s92
      %p94 = scmp.eq.s32.totalorder %s21, 0
      %p95 = por %p93, %p94
      %s97 = sadd.s32 %s96, 1
      %p100 = scmp.eq.s32.totalorder %s15, 1
      %p101 = scmp.ne.s32.totalorder %s96, %s98
      %p102 = scmp.eq.s32.totalorder %s15, 0
      %p103 = por %p101, %p102
      %p104 = scmp.ne.s32.totalorder %s96, %s98
      %p105 = scmp.eq.s32.totalorder %s20, 1
      %p106 = por %p104, %p105
      %p107 = scmp.ne.s32.totalorder %s98, %s99
      %p108 = scmp.eq.s32.totalorder %s20, 0
      %p109 = por %p107, %p108
      %p110 = scmp.ne.s32.totalorder %s98, %s99
      %p111 = scmp.eq.s32.totalorder %s21, 1
      %p112 = por %p110, %p111
      %p114 = scmp.ne.s32.totalorder %s99, %s113
      %p115 = scmp.eq.s32.totalorder %s21, 0
      %p116 = por %p114, %p115
      %s118 = sadd.s32 %s117, 1
      %p121 = scmp.eq.s32.totalorder %s15, 1
      %p122 = scmp.ne.s32.totalorder %s117, %s119
      %p123 = scmp.eq.s32.totalorder %s15, 0
      %p124 = por %p122, %p123
      %p125 = scmp.ne.s32.totalorder %s117, %s119
      %p126 = scmp.eq.s32.totalorder %s20, 1
      %p127 = por %p125, %p126
      %p128 = scmp.ne.s32.totalorder %s119, %s120
      %p129 = scmp.eq.s32.totalorder %s20, 0
      %p130 = por %p128, %p129
      %p131 = scmp.ne.s32.totalorder %s119, %s120
      %p132 = scmp.eq.s32.totalorder %s21, 1
      %p133 = por %p131, %p132
      %p135 = scmp.ne.s32.totalorder %s120, %s134
      %p136 = scmp.eq.s32.totalorder %s21, 0
      %p137 = por %p135, %p136
      %s139 = sadd.s32 %s138, 1
      %p142 = scmp.eq.s32.totalorder %s15, 1
      %p143 = scmp.ne.s32.totalorder %s138, %s140
      %p144 = scmp.eq.s32.totalorder %s15, 0
      %p145 = por %p143, %p144
      %p146 = scmp.ne.s32.totalorder %s138, %s140
      %p147 = scmp.eq.s32.totalorder %s20, 1
      %p148 = por %p146, %p147
      %p149 = scmp.ne.s32.totalorder %s140, %s141
      %p150 = scmp.eq.s32.totalorder %s20, 0
      %p151 = por %p149, %p150
      %p152 = scmp.ne.s32.totalorder %s140, %s141
      %p153 = scmp.eq.s32.totalorder %s21, 1
      %p154 = por %p152, %p153
      %p156 = scmp.ne.s32.totalorder %s141, %s155
      %p157 = scmp.eq.s32.totalorder %s21, 0
      %p158 = por %p156, %p157
      %s159 = ssub.s32 %s15, %s22
      %p160 = scmp.eq.s32.totalorder %s159, 0
      %s162 = sadd.s32 %s161, 1
      %s163 = scalar_select %p160, %s161, %s162
      %p166 = pneg %p160
      %p167 = scmp.eq.s32.totalorder %s15, 1
      %p168 = por %p166, %p167
      %p169 = scmp.ne.s32.totalorder %s161, %s164
      %p170 = scmp.eq.s32.totalorder %s15, 0
      %p171 = por %p169, %p170
      %p172 = scmp.ne.s32.totalorder %s161, %s164
      %p173 = scmp.eq.s32.totalorder %s20, 1
      %p174 = por %p172, %p173
      %p175 = scmp.ne.s32.totalorder %s164, %s165
      %p176 = scmp.eq.s32.totalorder %s20, 0
      %p177 = por %p175, %p176
      %p178 = scmp.ne.s32.totalorder %s164, %s165
      %p179 = scmp.eq.s32.totalorder %s21, 1
      %p180 = por %p178, %p179
      %p182 = scmp.ne.s32.totalorder %s165, %s181
      %p183 = scmp.eq.s32.totalorder %s21, 0
      %p184 = por %p182, %p183
      %p185 = scmp.le.s32.totalorder 1, %s15
      %p186 = scmp.lt.s32.totalorder %s15, 3
      %p187 = pnand %p185, %p186
      %p188 = pneg %p187
      // Predicated region
      $region9: #{tpu_custom_call.1} parent=5 // pred_check
        _
      $region10: #{tpu_custom_call.1} parent=5 // pred_check_branch
        %190 = sbr.rel (%p187) target = $region12
      $region11: #{tpu_custom_call.1} parent=5 // pred_region
        %s191 = ssub.s32 %s15, 1
        // Predicated region
        $region13: #{tpu_custom_call.1} parent=11 // pred_check
          %p192 = pneg %p88
        $region14: #{tpu_custom_call.1} parent=11 // pred_check_branch
          %194 = sbr.rel (%p192) target = $region16
        $region15: #{tpu_custom_call.1} parent=11 // pred_region
          _
        $region16: #{tpu_custom_call.1} parent=11 // pred_fallthru
          _
        // Predicated region
        $region17: #{tpu_custom_call.1} parent=11 // pred_check
          %p195 = pneg %p109
        $region18: #{tpu_custom_call.1} parent=11 // pred_check_branch
          %197 = sbr.rel (%p195) target = $region20
        $region19: #{tpu_custom_call.1} parent=11 // pred_region
          _
        $region20: #{tpu_custom_call.1} parent=11 // pred_fallthru
          _
        // Predicated region
        $region21: #{tpu_custom_call.1} parent=11 // pred_check
          %p198 = pneg %p130
        $region22: #{tpu_custom_call.1} parent=11 // pred_check_branch
          %200 = sbr.rel (%p198) target = $region24
        $region23: #{tpu_custom_call.1} parent=11 // pred_region
          _
        $region24: #{tpu_custom_call.1} parent=11 // pred_fallthru
          _
        // Predicated region
        $region25: #{tpu_custom_call.1} parent=11 // pred_check
          %p201 = pneg %p151
        $region26: #{tpu_custom_call.1} parent=11 // pred_check_branch
          %203 = sbr.rel (%p201) target = $region28
        $region27: #{tpu_custom_call.1} parent=11 // pred_region
          _
        $region28: #{tpu_custom_call.1} parent=11 // pred_fallthru
          _
      $region12: #{tpu_custom_call.1} parent=5 // pred_fallthru
        _
      %p204 = scmp.lt.s32.totalorder %s15, 2
      // Predicated region
      $region29: #{tpu_custom_call.1} parent=5 // pred_check
        %p205 = pneg %p204
      $region30: #{tpu_custom_call.1} parent=5 // pred_check_branch
        %207 = sbr.rel (%p205) target = $region32
      $region31: #{tpu_custom_call.1} parent=5 // pred_region
        // Predicated region
        $region33: #{tpu_custom_call.1} parent=31 // pred_check
          %p208 = pneg %p35
        $region34: #{tpu_custom_call.1} parent=31 // pred_check_branch
          %210 = sbr.rel (%p208) target = $region36
        $region35: #{tpu_custom_call.1} parent=31 // pred_region
          %s211 = smul.u32 16, %s15
          %p212 = scmp.lt.s32.totalorder %s211, 31
          %s213 = scalar_select %p212, %s211, 31
          %s214 = smul.addr %s213, 8
          %s215 = scalar_lea.vmem %s0, %s214
          %s216 = smul.u32 16, %s15
        $region36: #{tpu_custom_call.1} parent=31 // pred_fallthru
          _
        // Predicated region
        $region37: #{tpu_custom_call.1} parent=31 // pred_check
          %p217 = pneg %p61
        $region38: #{tpu_custom_call.1} parent=31 // pred_check_branch
          %219 = sbr.rel (%p217) target = $region40
        $region39: #{tpu_custom_call.1} parent=31 // pred_region
          %s220 = smul.u32 16, %s15
          %p221 = scmp.lt.s32.totalorder %s220, 31
          %s222 = scalar_select %p221, %s220, 31
          %s223 = smul.addr %s222, 8
          %s224 = scalar_lea.vmem %s1, %s223
          %s225 = smul.u32 16, %s15
        $region40: #{tpu_custom_call.1} parent=31 // pred_fallthru
          _
      $region32: #{tpu_custom_call.1} parent=5 // pred_fallthru
        _
      %p226 = scmp.le.s32.totalorder 1, %s15
      %p227 = scmp.lt.s32.totalorder %s15, 3
      %p228 = pnand %p226, %p227
      %p229 = pneg %p228
      // Predicated region
      $region41: #{tpu_custom_call.1} parent=5 // pred_check
        _
      $region42: #{tpu_custom_call.1} parent=5 // pred_check_branch
        %231 = sbr.rel (%p228) target = $region44
      $region43: #{tpu_custom_call.1} parent=5 // pred_region
        %s232 = ssub.s32 %s15, 1
        %s233 = smul.u32 16, %s20
        %p234 = scmp.lt.s32.totalorder %s233, 31
        %s235 = scalar_select %p234, %s233, 31
        %s236 = smul.addr %s235, 8
        %s237 = scalar_lea.vmem %s0, %s236
        %p238 = pneg %p41
        %p239 = pneg %p38
        %s240 = smul.u32 16, %s20
        %p241 = scmp.lt.s32.totalorder %s240, 31
        %s242 = scalar_select %p241, %s240, 31
        %s243 = smul.addr %s242, 8
        %s244 = scalar_lea.vmem %s1, %s243
        %p245 = pneg %p67
        %p246 = pneg %p64
        %p247 = pneg %p88
        %p248 = pneg %p85
        %p249 = pneg %p109
        %p250 = pneg %p106
        %p251 = pneg %p130
        %p252 = pneg %p127
        %p253 = pneg %p151
        %p254 = pneg %p148
        %p255 = pneg %p177
        %p256 = pneg %p174
        %s257 = sand.u32 %s164, 1
        %s258 = scalar_lea.sflag [#allocation3], %s257
        %s259 = sand.u32 %s164, 1
        %s260 = scalar_lea.vmem [#allocation2], %s259
        %s261 = smul.u32 16, %s20
        %p262 = scmp.lt.s32.totalorder %s261, 31
        %s263 = scalar_select %p262, %s261, 31
        %s264 = smul.addr %s263, 8
        %s265 = scalar_lea.vmem %s0, %s264
        %s266 = smul.u32 16, %s20
        %s267 = smul.u32 16, %s20
        %p268 = scmp.lt.s32.totalorder %s267, 31
        %s269 = scalar_select %p268, %s267, 31
        %s270 = smul.addr %s269, 8
        %s271 = scalar_lea.vmem %s1, %s270
        %s272 = smul.u32 16, %s20
        %v273 = vld [vmem:[%s265] sm:$0xff]
        %v274 = vld [vmem:[%s265 + $0x8] sm:$0xff]
        %v275 = vld [vmem:[%s265 + $0x10] sm:$0xff]
        %v276 = vld [vmem:[%s265 + $0x18] sm:$0xff]
        %v277 = vld [vmem:[%s265 + $0x20] sm:$0xff]
        %v278 = vld [vmem:[%s265 + $0x28] sm:$0xff]
        %v279 = vld [vmem:[%s265 + $0x30] sm:$0xff]
        %v280 = vld [vmem:[%s265 + $0x38] sm:$0xff]
        %v281 = vld [vmem:[%s265 + $0x40] sm:$0xff]
        %v282 = vld [vmem:[%s265 + $0x48] sm:$0xff]
        %v283 = vld [vmem:[%s265 + $0x50] sm:$0xff]
        %v284 = vld [vmem:[%s265 + $0x58] sm:$0xff]
        %v285 = vld [vmem:[%s265 + $0x60] sm:$0xff]
        %v286 = vld [vmem:[%s265 + $0x68] sm:$0xff]
        %v287 = vld [vmem:[%s265 + $0x70] sm:$0xff]
        %v288 = vld [vmem:[%s265 + $0x78] sm:$0xff]
        %v289 = vld [vmem:[%s2] sm:$0xff]
        %v290 = vld [vmem:[%s2 + $0x8] sm:$0xff]
        %v291 = vld [vmem:[%s2 + $0x10] sm:$0xff]
        %v292 = vld [vmem:[%s2 + $0x18] sm:$0xff]
        %v293 = vld [vmem:[%s3] sm:$0x1]
        %v295 = vlaneseq
        %v296 = vshrl.u32 %v295, 7
        %v297 = vsub.s32 0, %v296
        %v298 = vrot.slane %v293, %v297
        %vm300 = vcmask 261120
        %v302 = vsel %vm300, %v273, 0
        %v305 = vsel %vm300, %v274, 0
        %v308 = vsel %vm300, %v275, 0
        %v311 = vsel %vm300, %v276, 0
        %v314 = vsel %vm300, %v277, 0
        %v317 = vsel %vm300, %v278, 0
        %v320 = vsel %vm300, %v279, 0
        %v323 = vsel %vm300, %v280, 0
        %v326 = vsel %vm300, %v281, 0
        %v329 = vsel %vm300, %v282, 0
        %v332 = vsel %vm300, %v283, 0
        %v335 = vsel %vm300, %v284, 0
        %v338 = vsel %vm300, %v285, 0
        %v341 = vsel %vm300, %v286, 0
        %v344 = vsel %vm300, %v287, 0
        %v347 = vsel %vm300, %v288, 0
        %349 = vmatprep.subr.mxu0 0.0
        %350 = vmatpush1.msra.mxu0 0.0
        %351 = vmatprep.subr.mxu0 0.0
        %352 = vmatpush1.msra.mxu0 0.0
        %353 = vmatprep.subr.mxu0 0.0
        %354 = vmatpush1.msra.mxu0 0.0
        %355 = vmatprep.subr.mxu0 0.0
        %356 = vmatpush1.msra.mxu0 0.0
        %357 = vmatprep.subr.mxu0 0.0
        %358 = vmatpush1.msra.mxu0 0.0
        %359 = vmatprep.subr.mxu0 0.0
        %360 = vmatpush1.msra.mxu0 0.0
        %361 = vmatprep.subr.mxu0 0.0
        %362 = vmatpush1.msra.mxu0 0.0
        %363 = vmatprep.subr.mxu0 0.0
        %364 = vmatpush1.msra.mxu0 0.0
        %365 = vmatprep.subr.mxu0 0.0
        %366 = vmatpush1.msra.mxu0 0.0
        %367 = vmatprep.subr.mxu0 0.0
        %368 = vmatpush1.msra.mxu0 0.0
        %369 = vmatprep.subr.mxu0 0.0
        %370 = vmatpush1.msra.mxu0 0.0
        %371 = vmatprep.subr.mxu0 0.0
        %372 = vmatpush1.msra.mxu0 0.0
        %373 = vmatprep.subr.mxu0 0.0
        %374 = vmatpush1.msra.mxu0 %v292
        %375 = vmatprep.subr.mxu0 0.0
        %376 = vmatpush1.msra.mxu0 %v291
        %377 = vmatprep.subr.mxu0 0.0
        %378 = vmatpush1.msra.mxu0 %v290
        %379 = vmatprep.subr.mxu0 0.0
        %380 = vmatpush1.msra.mxu0 %v289
        %381 = vmatprep.subr.mxu0 0.0
        %382 = vmatpush2.msra.mxu0 0.0
        %383 = vmatprep.subr.mxu0 0.0
        %384 = vmatpush2.msra.mxu0 0.0
        %385 = vmatprep.subr.mxu0 0.0
        %386 = vmatpush2.msra.mxu0 0.0
        %387 = vmatprep.subr.mxu0 0.0
        %388 = vmatpush2.msra.mxu0 0.0
        %389 = vmatprep.subr.mxu0 0.0
        %390 = vmatpush2.msra.mxu0 0.0
        %391 = vmatprep.subr.mxu0 0.0
        %392 = vmatpush2.msra.mxu0 0.0
        %393 = vmatprep.subr.mxu0 0.0
        %394 = vmatpush2.msra.mxu0 0.0
        %395 = vmatprep.subr.mxu0 0.0
        %396 = vmatpush2.msra.mxu0 0.0
        %397 = vmatprep.subr.mxu0 0.0
        %398 = vmatpush2.msra.mxu0 0.0
        %399 = vmatprep.subr.mxu0 0.0
        %400 = vmatpush2.msra.mxu0 0.0
        %401 = vmatprep.subr.mxu0 0.0
        %402 = vmatpush2.msra.mxu0 0.0
        %403 = vmatprep.subr.mxu0 0.0
        %404 = vmatpush2.msra.mxu0 0.0
        %405 = vmatprep.subr.mxu0 0.0
        %406 = vmatpush2.msra.mxu0 0.0
        %407 = vmatprep.subr.mxu0 0.0
        %408 = vmatpush2.msra.mxu0 0.0
        %409 = vmatprep.subr.mxu0 0.0
        %410 = vmatpush2.msra.mxu0 0.0
        %411 = vmatprep.subr.mxu0 0.0
        %412 = vmatpush2.msra.mxu0 0.0
        %413 = vmatprep.mubr.f32.mxu0 0.0
        %414 = vmatmul.mubr.f32.gmra.mxu0 %v302
        %v415 = vpop.f32.mrf.mxu0
        %v416 = vadd.f32 %v298, %v415
        %v417 = vpop.f32.mrf.mxu0
        %418 = vmatprep.mubr.f32.mxu0 0.0
        %419 = vmatmul.mubr.f32.gmra.mxu0 %v305
        %v420 = vpop.f32.mrf.mxu0
        %v421 = vadd.f32 %v298, %v420
        %v422 = vpop.f32.mrf.mxu0
        %423 = vmatprep.mubr.f32.mxu0 0.0
        %424 = vmatmul.mubr.f32.gmra.mxu0 %v308
        %v425 = vpop.f32.mrf.mxu0
        %v426 = vadd.f32 %v298, %v425
        %v427 = vpop.f32.mrf.mxu0
        %428 = vmatprep.mubr.f32.mxu0 0.0
        %429 = vmatmul.mubr.f32.gmra.mxu0 %v311
        %v430 = vpop.f32.mrf.mxu0
        %v431 = vadd.f32 %v298, %v430
        %v432 = vpop.f32.mrf.mxu0
        %433 = vmatprep.mubr.f32.mxu0 0.0
        %434 = vmatmul.mubr.f32.gmra.mxu0 %v314
        %v435 = vpop.f32.mrf.mxu0
        %v436 = vadd.f32 %v298, %v435
        %v437 = vpop.f32.mrf.mxu0
        %438 = vmatprep.mubr.f32.mxu0 0.0
        %439 = vmatmul.mubr.f32.gmra.mxu0 %v317
        %v440 = vpop.f32.mrf.mxu0
        %v441 = vadd.f32 %v298, %v440
        %v442 = vpop.f32.mrf.mxu0
        %443 = vmatprep.mubr.f32.mxu0 0.0
        %444 = vmatmul.mubr.f32.gmra.mxu0 %v320
        %v445 = vpop.f32.mrf.mxu0
        %v446 = vadd.f32 %v298, %v445
        %v447 = vpop.f32.mrf.mxu0
        %448 = vmatprep.mubr.f32.mxu0 0.0
        %449 = vmatmul.mubr.f32.gmra.mxu0 %v323
        %v450 = vpop.f32.mrf.mxu0
        %v451 = vadd.f32 %v298, %v450
        %v452 = vpop.f32.mrf.mxu0
        %453 = vmatprep.mubr.f32.mxu0 0.0
        %454 = vmatmul.mubr.f32.gmra.mxu0 %v326
        %v455 = vpop.f32.mrf.mxu0
        %v456 = vadd.f32 %v298, %v455
        %v457 = vpop.f32.mrf.mxu0
        %458 = vmatprep.mubr.f32.mxu0 0.0
        %459 = vmatmul.mubr.f32.gmra.mxu0 %v329
        %v460 = vpop.f32.mrf.mxu0
        %v461 = vadd.f32 %v298, %v460
        %v462 = vpop.f32.mrf.mxu0
        %463 = vmatprep.mubr.f32.mxu0 0.0
        %464 = vmatmul.mubr.f32.gmra.mxu0 %v332
        %v465 = vpop.f32.mrf.mxu0
        %v466 = vadd.f32 %v298, %v465
        %v467 = vpop.f32.mrf.mxu0
        %468 = vmatprep.mubr.f32.mxu0 0.0
        %469 = vmatmul.mubr.f32.gmra.mxu0 %v335
        %v470 = vpop.f32.mrf.mxu0
        %v471 = vadd.f32 %v298, %v470
        %v472 = vpop.f32.mrf.mxu0
        %473 = vmatprep.mubr.f32.mxu0 0.0
        %474 = vmatmul.mubr.f32.gmra.mxu0 %v338
        %v475 = vpop.f32.mrf.mxu0
        %v476 = vadd.f32 %v298, %v475
        %v477 = vpop.f32.mrf.mxu0
        %478 = vmatprep.mubr.f32.mxu0 0.0
        %479 = vmatmul.mubr.f32.gmra.mxu0 %v341
        %v480 = vpop.f32.mrf.mxu0
        %v481 = vadd.f32 %v298, %v480
        %v482 = vpop.f32.mrf.mxu0
        %483 = vmatprep.mubr.f32.mxu0 0.0
        %484 = vmatmul.mubr.f32.gmra.mxu0 %v344
        %v485 = vpop.f32.mrf.mxu0
        %v486 = vadd.f32 %v298, %v485
        %v487 = vpop.f32.mrf.mxu0
        %488 = vmatprep.mubr.f32.mxu0 0.0
        %489 = vmatmul.mubr.f32.gmra.mxu0 %v347
        %v490 = vpop.f32.mrf.mxu0
        %v491 = vadd.f32 %v298, %v490
        %v492 = vpop.f32.mrf.mxu0
        %493 = vdwg.mxu0
        %v494 = vmul.f32 %v416, 0.1
        %v495 = vmul.f32 %v421, 0.1
        %v496 = vmul.f32 %v426, 0.1
        %v497 = vmul.f32 %v431, 0.1
        %v498 = vmul.f32 %v436, 0.1
        %v499 = vmul.f32 %v441, 0.1
        %v500 = vmul.f32 %v446, 0.1
        %v501 = vmul.f32 %v451, 0.1
        %v502 = vmul.f32 %v456, 0.1
        %v503 = vmul.f32 %v461, 0.1
        %v504 = vmul.f32 %v466, 0.1
        %v505 = vmul.f32 %v471, 0.1
        %v506 = vmul.f32 %v476, 0.1
        %v507 = vmul.f32 %v481, 0.1
        %v508 = vmul.f32 %v486, 0.1
        %v509 = vmul.f32 %v491, 0.1
        %v510 = vmax.f32 %v416, %v494
        %v511 = vmax.f32 %v421, %v495
        %v512 = vmax.f32 %v426, %v496
        %v513 = vmax.f32 %v431, %v497
        %v514 = vmax.f32 %v436, %v498
        %v515 = vmax.f32 %v441, %v499
        %v516 = vmax.f32 %v446, %v500
        %v517 = vmax.f32 %v451, %v501
        %v518 = vmax.f32 %v456, %v502
        %v519 = vmax.f32 %v461, %v503
        %v520 = vmax.f32 %v466, %v504
        %v521 = vmax.f32 %v471, %v505
        %v522 = vmax.f32 %v476, %v506
        %v523 = vmax.f32 %v481, %v507
        %v524 = vmax.f32 %v486, %v508
        %v525 = vmax.f32 %v491, %v509
        %v526 = vld [vmem:[%s4] sm:$0xff]
        %v527 = vld [vmem:[%s4 + $0x8] sm:$0xff]
        %v528 = vld [vmem:[%s4 + $0x10] sm:$0xff]
        %v529 = vld [vmem:[%s4 + $0x18] sm:$0xff]
        %v530 = vld [vmem:[%s4 + $0x20] sm:$0xff]
        %v531 = vld [vmem:[%s4 + $0x28] sm:$0xff]
        %v532 = vld [vmem:[%s5] sm:$0x1]
        %v534 = vlaneseq
        %v535 = vshrl.u32 %v534, 7
        %v536 = vsub.s32 0, %v535
        %v537 = vrot.slane %v532, %v536
        %vm539 = vcmask 392192
        %v541 = vsel %vm539, %v510, 0
        %v544 = vsel %vm539, %v511, 0
        %v547 = vsel %vm539, %v512, 0
        %v550 = vsel %vm539, %v513, 0
        %v553 = vsel %vm539, %v514, 0
        %v556 = vsel %vm539, %v515, 0
        %v559 = vsel %vm539, %v516, 0
        %v562 = vsel %vm539, %v517, 0
        %v565 = vsel %vm539, %v518, 0
        %v568 = vsel %vm539, %v519, 0
        %v571 = vsel %vm539, %v520, 0
        %v574 = vsel %vm539, %v521, 0
        %v577 = vsel %vm539, %v522, 0
        %v580 = vsel %vm539, %v523, 0
        %v583 = vsel %vm539, %v524, 0
        %v586 = vsel %vm539, %v525, 0
        %588 = vmatprep.subr.mxu0 0.0
        %589 = vmatpush1.msra.mxu0 0.0
        %590 = vmatprep.subr.mxu0 0.0
        %591 = vmatpush1.msra.mxu0 0.0
        %592 = vmatprep.subr.mxu0 0.0
        %593 = vmatpush1.msra.mxu0 0.0
        %594 = vmatprep.subr.mxu0 0.0
        %595 = vmatpush1.msra.mxu0 0.0
        %596 = vmatprep.subr.mxu0 0.0
        %597 = vmatpush1.msra.mxu0 0.0
        %598 = vmatprep.subr.mxu0 0.0
        %599 = vmatpush1.msra.mxu0 0.0
        %600 = vmatprep.subr.mxu0 0.0
        %601 = vmatpush1.msra.mxu0 0.0
        %602 = vmatprep.subr.mxu0 0.0
        %603 = vmatpush1.msra.mxu0 0.0
        %604 = vmatprep.subr.mxu0 0.0
        %605 = vmatpush1.msra.mxu0 0.0
        %606 = vmatprep.subr.mxu0 0.0
        %607 = vmatpush1.msra.mxu0 0.0
        %608 = vmatprep.subr.mxu0 0.0
        %609 = vmatpush1.msra.mxu0 %v531
        %610 = vmatprep.subr.mxu0 0.0
        %611 = vmatpush1.msra.mxu0 %v530
        %612 = vmatprep.subr.mxu0 0.0
        %613 = vmatpush1.msra.mxu0 %v529
        %614 = vmatprep.subr.mxu0 0.0
        %615 = vmatpush1.msra.mxu0 %v528
        %616 = vmatprep.subr.mxu0 0.0
        %617 = vmatpush1.msra.mxu0 %v527
        %618 = vmatprep.subr.mxu0 0.0
        %619 = vmatpush1.msra.mxu0 %v526
        %620 = vmatprep.subr.mxu0 0.0
        %621 = vmatpush2.msra.mxu0 0.0
        %622 = vmatprep.subr.mxu0 0.0
        %623 = vmatpush2.msra.mxu0 0.0
        %624 = vmatprep.subr.mxu0 0.0
        %625 = vmatpush2.msra.mxu0 0.0
        %626 = vmatprep.subr.mxu0 0.0
        %627 = vmatpush2.msra.mxu0 0.0
        %628 = vmatprep.subr.mxu0 0.0
        %629 = vmatpush2.msra.mxu0 0.0
        %630 = vmatprep.subr.mxu0 0.0
        %631 = vmatpush2.msra.mxu0 0.0
        %632 = vmatprep.subr.mxu0 0.0
        %633 = vmatpush2.msra.mxu0 0.0
        %634 = vmatprep.subr.mxu0 0.0
        %635 = vmatpush2.msra.mxu0 0.0
        %636 = vmatprep.subr.mxu0 0.0
        %637 = vmatpush2.msra.mxu0 0.0
        %638 = vmatprep.subr.mxu0 0.0
        %639 = vmatpush2.msra.mxu0 0.0
        %640 = vmatprep.subr.mxu0 0.0
        %641 = vmatpush2.msra.mxu0 0.0
        %642 = vmatprep.subr.mxu0 0.0
        %643 = vmatpush2.msra.mxu0 0.0
        %644 = vmatprep.subr.mxu0 0.0
        %645 = vmatpush2.msra.mxu0 0.0
        %646 = vmatprep.subr.mxu0 0.0
        %647 = vmatpush2.msra.mxu0 0.0
        %648 = vmatprep.subr.mxu0 0.0
        %649 = vmatpush2.msra.mxu0 0.0
        %650 = vmatprep.subr.mxu0 0.0
        %651 = vmatpush2.msra.mxu0 0.0
        %652 = vmatprep.mubr.f32.mxu0 0.0
        %653 = vmatmul.mubr.f32.gmra.mxu0 %v541
        %v654 = vpop.f32.mrf.mxu0
        %v655 = vadd.f32 %v537, %v654
        %v656 = vpop.f32.mrf.mxu0
        %657 = vmatprep.mubr.f32.mxu0 0.0
        %658 = vmatmul.mubr.f32.gmra.mxu0 %v544
        %v659 = vpop.f32.mrf.mxu0
        %v660 = vadd.f32 %v537, %v659
        %v661 = vpop.f32.mrf.mxu0
        %662 = vmatprep.mubr.f32.mxu0 0.0
        %663 = vmatmul.mubr.f32.gmra.mxu0 %v547
        %v664 = vpop.f32.mrf.mxu0
        %v665 = vadd.f32 %v537, %v664
        %v666 = vpop.f32.mrf.mxu0
        %667 = vmatprep.mubr.f32.mxu0 0.0
        %668 = vmatmul.mubr.f32.gmra.mxu0 %v550
        %v669 = vpop.f32.mrf.mxu0
        %v670 = vadd.f32 %v537, %v669
        %v671 = vpop.f32.mrf.mxu0
        %672 = vmatprep.mubr.f32.mxu0 0.0
        %673 = vmatmul.mubr.f32.gmra.mxu0 %v553
        %v674 = vpop.f32.mrf.mxu0
        %v675 = vadd.f32 %v537, %v674
        %v676 = vpop.f32.mrf.mxu0
        %677 = vmatprep.mubr.f32.mxu0 0.0
        %678 = vmatmul.mubr.f32.gmra.mxu0 %v556
        %v679 = vpop.f32.mrf.mxu0
        %v680 = vadd.f32 %v537, %v679
        %v681 = vpop.f32.mrf.mxu0
        %682 = vmatprep.mubr.f32.mxu0 0.0
        %683 = vmatmul.mubr.f32.gmra.mxu0 %v559
        %v684 = vpop.f32.mrf.mxu0
        %v685 = vadd.f32 %v537, %v684
        %v686 = vpop.f32.mrf.mxu0
        %687 = vmatprep.mubr.f32.mxu0 0.0
        %688 = vmatmul.mubr.f32.gmra.mxu0 %v562
        %v689 = vpop.f32.mrf.mxu0
        %v690 = vadd.f32 %v537, %v689
        %v691 = vpop.f32.mrf.mxu0
        %692 = vmatprep.mubr.f32.mxu0 0.0
        %693 = vmatmul.mubr.f32.gmra.mxu0 %v565
        %v694 = vpop.f32.mrf.mxu0
        %v695 = vadd.f32 %v537, %v694
        %v696 = vpop.f32.mrf.mxu0
        %697 = vmatprep.mubr.f32.mxu0 0.0
        %698 = vmatmul.mubr.f32.gmra.mxu0 %v568
        %v699 = vpop.f32.mrf.mxu0
        %v700 = vadd.f32 %v537, %v699
        %v701 = vpop.f32.mrf.mxu0
        %702 = vmatprep.mubr.f32.mxu0 0.0
        %703 = vmatmul.mubr.f32.gmra.mxu0 %v571
        %v704 = vpop.f32.mrf.mxu0
        %v705 = vadd.f32 %v537, %v704
        %v706 = vpop.f32.mrf.mxu0
        %707 = vmatprep.mubr.f32.mxu0 0.0
        %708 = vmatmul.mubr.f32.gmra.mxu0 %v574
        %v709 = vpop.f32.mrf.mxu0
        %v710 = vadd.f32 %v537, %v709
        %v711 = vpop.f32.mrf.mxu0
        %712 = vmatprep.mubr.f32.mxu0 0.0
        %713 = vmatmul.mubr.f32.gmra.mxu0 %v577
        %v714 = vpop.f32.mrf.mxu0
        %v715 = vadd.f32 %v537, %v714
        %v716 = vpop.f32.mrf.mxu0
        %717 = vmatprep.mubr.f32.mxu0 0.0
        %718 = vmatmul.mubr.f32.gmra.mxu0 %v580
        %v719 = vpop.f32.mrf.mxu0
        %v720 = vadd.f32 %v537, %v719
        %v721 = vpop.f32.mrf.mxu0
        %722 = vmatprep.mubr.f32.mxu0 0.0
        %723 = vmatmul.mubr.f32.gmra.mxu0 %v583
        %v724 = vpop.f32.mrf.mxu0
        %v725 = vadd.f32 %v537, %v724
        %v726 = vpop.f32.mrf.mxu0
        %727 = vmatprep.mubr.f32.mxu0 0.0
        %728 = vmatmul.mubr.f32.gmra.mxu0 %v586
        %v729 = vpop.f32.mrf.mxu0
        %v730 = vadd.f32 %v537, %v729
        %v731 = vpop.f32.mrf.mxu0
        %732 = vdwg.mxu0
        %v733 = vmax.f32 %v655, 0.0
        %v734 = vmax.f32 %v660, 0.0
        %v735 = vmax.f32 %v665, 0.0
        %v736 = vmax.f32 %v670, 0.0
        %v737 = vmax.f32 %v675, 0.0
        %v738 = vmax.f32 %v680, 0.0
        %v739 = vmax.f32 %v685, 0.0
        %v740 = vmax.f32 %v690, 0.0
        %v741 = vmax.f32 %v695, 0.0
        %v742 = vmax.f32 %v700, 0.0
        %v743 = vmax.f32 %v705, 0.0
        %v744 = vmax.f32 %v710, 0.0
        %v745 = vmax.f32 %v715, 0.0
        %v746 = vmax.f32 %v720, 0.0
        %v747 = vmax.f32 %v725, 0.0
        %v748 = vmax.f32 %v730, 0.0
        %v749 = vld [vmem:[%s271] sm:$0xff]
        %v750 = vld [vmem:[%s271 + $0x8] sm:$0xff]
        %v751 = vld [vmem:[%s271 + $0x10] sm:$0xff]
        %v752 = vld [vmem:[%s271 + $0x18] sm:$0xff]
        %v753 = vld [vmem:[%s271 + $0x20] sm:$0xff]
        %v754 = vld [vmem:[%s271 + $0x28] sm:$0xff]
        %v755 = vld [vmem:[%s271 + $0x30] sm:$0xff]
        %v756 = vld [vmem:[%s271 + $0x38] sm:$0xff]
        %v757 = vld [vmem:[%s271 + $0x40] sm:$0xff]
        %v758 = vld [vmem:[%s271 + $0x48] sm:$0xff]
        %v759 = vld [vmem:[%s271 + $0x50] sm:$0xff]
        %v760 = vld [vmem:[%s271 + $0x58] sm:$0xff]
        %v761 = vld [vmem:[%s271 + $0x60] sm:$0xff]
        %v762 = vld [vmem:[%s271 + $0x68] sm:$0xff]
        %v763 = vld [vmem:[%s271 + $0x70] sm:$0xff]
        %v764 = vld [vmem:[%s271 + $0x78] sm:$0xff]
        %v765 = vmul.f32 %v733, %v749
        %v766 = vmul.f32 %v734, %v750
        %v767 = vmul.f32 %v735, %v751
        %v768 = vmul.f32 %v736, %v752
        %v769 = vmul.f32 %v737, %v753
        %v770 = vmul.f32 %v738, %v754
        %v771 = vmul.f32 %v739, %v755
        %v772 = vmul.f32 %v740, %v756
        %v773 = vmul.f32 %v741, %v757
        %v774 = vmul.f32 %v742, %v758
        %v775 = vmul.f32 %v743, %v759
        %v776 = vmul.f32 %v744, %v760
        %v777 = vmul.f32 %v745, %v761
        %v778 = vmul.f32 %v746, %v762
        %v779 = vmul.f32 %v747, %v763
        %v780 = vmul.f32 %v748, %v764
        %vm781 = vcmask 80896
        %v783 = vsel %vm781, 1.0, 0
        %v786 = vsel %vm781, %v765, 0
        %v789 = vsel %vm781, %v766, 0
        %v792 = vsel %vm781, %v767, 0
        %v795 = vsel %vm781, %v768, 0
        %v798 = vsel %vm781, %v769, 0
        %v801 = vsel %vm781, %v770, 0
        %v804 = vsel %vm781, %v771, 0
        %v807 = vsel %vm781, %v772, 0
        %v810 = vsel %vm781, %v773, 0
        %v813 = vsel %vm781, %v774, 0
        %v816 = vsel %vm781, %v775, 0
        %v819 = vsel %vm781, %v776, 0
        %v822 = vsel %vm781, %v777, 0
        %v825 = vsel %vm781, %v778, 0
        %v828 = vsel %vm781, %v779, 0
        %v831 = vsel %vm781, %v780, 0
        %833 = vmatprep.subr.mxu0 0.0
        %834 = vmatpush1.xpose.msra.mxu0 %v831
        %835 = vmatprep.subr.mxu0 0.0
        %836 = vmatpush1.xpose.msra.mxu0 %v828
        %837 = vmatprep.subr.mxu0 0.0
        %838 = vmatpush1.xpose.msra.mxu0 %v825
        %839 = vmatprep.subr.mxu0 0.0
        %840 = vmatpush1.xpose.msra.mxu0 %v822
        %841 = vmatprep.subr.mxu0 0.0
        %842 = vmatpush1.xpose.msra.mxu0 %v819
        %843 = vmatprep.subr.mxu0 0.0
        %844 = vmatpush1.xpose.msra.mxu0 %v816
        %845 = vmatprep.subr.mxu0 0.0
        %846 = vmatpush1.xpose.msra.mxu0 %v813
        %847 = vmatprep.subr.mxu0 0.0
        %848 = vmatpush1.xpose.msra.mxu0 %v810
        %849 = vmatprep.subr.mxu0 0.0
        %850 = vmatpush1.xpose.msra.mxu0 %v807
        %851 = vmatprep.subr.mxu0 0.0
        %852 = vmatpush1.xpose.msra.mxu0 %v804
        %853 = vmatprep.subr.mxu0 0.0
        %854 = vmatpush1.xpose.msra.mxu0 %v801
        %855 = vmatprep.subr.mxu0 0.0
        %856 = vmatpush1.xpose.msra.mxu0 %v798
        %857 = vmatprep.subr.mxu0 0.0
        %858 = vmatpush1.xpose.msra.mxu0 %v795
        %859 = vmatprep.subr.mxu0 0.0
        %860 = vmatpush1.xpose.msra.mxu0 %v792
        %861 = vmatprep.subr.mxu0 0.0
        %862 = vmatpush1.xpose.msra.mxu0 %v789
        %863 = vmatprep.subr.mxu0 0.0
        %864 = vmatpush1.xpose.msra.mxu0 %v786
        %865 = vmatprep.subr.mxu0 0.0
        %866 = vmatpush2.xpose.msra.mxu0 0.0
        %867 = vmatprep.subr.mxu0 0.0
        %868 = vmatpush2.xpose.msra.mxu0 0.0
        %869 = vmatprep.subr.mxu0 0.0
        %870 = vmatpush2.xpose.msra.mxu0 0.0
        %871 = vmatprep.subr.mxu0 0.0
        %872 = vmatpush2.xpose.msra.mxu0 0.0
        %873 = vmatprep.subr.mxu0 0.0
        %874 = vmatpush2.xpose.msra.mxu0 0.0
        %875 = vmatprep.subr.mxu0 0.0
        %876 = vmatpush2.xpose.msra.mxu0 0.0
        %877 = vmatprep.subr.mxu0 0.0
        %878 = vmatpush2.xpose.msra.mxu0 0.0
        %879 = vmatprep.subr.mxu0 0.0
        %880 = vmatpush2.xpose.msra.mxu0 0.0
        %881 = vmatprep.subr.mxu0 0.0
        %882 = vmatpush2.xpose.msra.mxu0 0.0
        %883 = vmatprep.subr.mxu0 0.0
        %884 = vmatpush2.xpose.msra.mxu0 0.0
        %885 = vmatprep.subr.mxu0 0.0
        %886 = vmatpush2.xpose.msra.mxu0 0.0
        %887 = vmatprep.subr.mxu0 0.0
        %888 = vmatpush2.xpose.msra.mxu0 0.0
        %889 = vmatprep.subr.mxu0 0.0
        %890 = vmatpush2.xpose.msra.mxu0 0.0
        %891 = vmatprep.subr.mxu0 0.0
        %892 = vmatpush2.xpose.msra.mxu0 0.0
        %893 = vmatprep.subr.mxu0 0.0
        %894 = vmatpush2.xpose.msra.mxu0 0.0
        %895 = vmatprep.subr.mxu0 0.0
        %896 = vmatpush2.xpose.msra.mxu0 0.0
        %897 = vmatprep.mubr.f32.mxu0 0.0
        %898 = vmatmul.mubr.f32.gmra.mxu0 %v783
        %v899 = vpop.f32.mrf.mxu0
        %v900 = vadd.f32 0.0, %v899
        %v901 = vpop.f32.mrf.mxu0
        %902 = vdwg.mxu0
        %903 = vst [vmem:[%s260] sm:$0x1] %v900
        %s904 = sand.u32 %s164, 1
        %s905 = scalar_lea.sflag [#allocation3], %s904
        %s906 = sand.u32 %s164, 1
        %s907 = scalar_lea.vmem [#allocation2], %s906
        // Predicated region
        $region45: #{tpu_custom_call.1} parent=43 // pred_check
          %p908 = pneg %p174
        $region46: #{tpu_custom_call.1} parent=43 // pred_check_branch
          %910 = sbr.rel (%p908) target = $region48
        $region47: #{tpu_custom_call.1} parent=43 // pred_region
          %s912 = ssub.s32 16, 16
          %913 = vsyncadd %s905, %s912
          %s914 = smul.addr %s20, 16
          %s915 = scalar_lea.hbm %s6, %s914
          %s917 = sshll.u32 %s907, 4
          %s918 = int_to_ptr.vmem [resolvable:$true] %s917
          %920 = dma.vmem_to_hbm [thread:$0]  %s918, 16, %s915, %s905
        $region48: #{tpu_custom_call.1} parent=43 // pred_fallthru
          _
      $region44: #{tpu_custom_call.1} parent=5 // pred_fallthru
        _
      %p921 = scmp.le.s32.totalorder 2, %s15
      // Predicated region
      $region49: #{tpu_custom_call.1} parent=5 // pred_check
        %p922 = pneg %p921
      $region50: #{tpu_custom_call.1} parent=5 // pred_check_branch
        %924 = sbr.rel (%p922) target = $region52
      $region51: #{tpu_custom_call.1} parent=5 // pred_region
        %s925 = ssub.s32 %s15, 2
        // Predicated region
        $region53: #{tpu_custom_call.1} parent=51 // pred_check
          %p926 = pneg %p180
        $region54: #{tpu_custom_call.1} parent=51 // pred_check_branch
          %928 = sbr.rel (%p926) target = $region56
        $region55: #{tpu_custom_call.1} parent=51 // pred_region
          %s929 = sand.u32 %s165, 1
          %s930 = scalar_lea.sflag [#allocation3], %s929
          %s931 = sand.u32 %s165, 1
          %s932 = scalar_lea.vmem [#allocation2], %s931
          %933 = dma.done %s930, 16
        $region56: #{tpu_custom_call.1} parent=51 // pred_fallthru
          _
      $region52: #{tpu_custom_call.1} parent=5 // pred_fallthru
        _
    $region6: #{tpu_custom_call.1} parent=1 // loop_footer
      %s19 = sadd.s32 1, %s15
    $region7: #{tpu_custom_call.1} parent=1 // loop_footer_branch
      %14 = sbr.rel target = $region3
    $region8: #{tpu_custom_call.1} parent=1 // loop_exit
      _
    %934 = vsyncpa [#allocation3], 1
    %s935 = scalar_lea.sflag [#allocation3], 1
    %936 = vsyncpa %s935, 1

</llo_original>
